<compile_context>
chip_gen: v7x
topology: tpu7x:2x2x1
jax: 0.10.0
libtpu: 0.0.40
codegen_flags: <defaults>
</compile_context>

<pallas_src>
import functools
import math

import jax
import jax.numpy as jnp
from jax.experimental import pallas as pl
from jax.experimental.pallas import tpu as pltpu

# Packed rows (rows of the [*, 128]-packed activation) per grid step at the
# default tile; ~4.3 KiB of VMEM per packed row (double-buffered f32 I/O plus
# f32/bf16 intermediates), so 8192 rows ~= 35 MiB < 48 MiB limit < 64 MiB v7x.
_VMEM_PACKED_ROW_CAP = 8192
_SINGLE_STEP_PACKED_ROWS = 1024      # below this, run one low-latency step
_VMEM_LIMIT_BYTES = 48 * 1024 * 1024


def _leaky_relu(x, slope=0.01):
    return jnp.where(x > 0, x, slope * x)


def _round_up(n, m):
    return ((n + m - 1) // m) * m


def _cdiv(a, b):
    return -(-a // b)


def _packing_factor(input_size):
    """Rows packed per 128-lane row. Falls back to 1 for unfriendly sizes."""
    p = 128 // math.gcd(input_size, 128)
    # Block-diagonal weights scale as p^2; for feature sizes sharing few
    # factors with 128 (e.g. 33 -> p=128) packing would waste huge VMEM and
    # MXU zero-work, so fall back to no packing (masked stores instead).
    return p if p <= 8 else 1


def _block_diag(w, p):
    """p-way block-diagonal replication of a [a, b] weight -> [p*a, p*b]."""
    if p == 1:
        return w
    a, b = w.shape
    out = jnp.zeros((p * a, p * b), w.dtype)
    for i in range(p):
        out = out.at[i * a:(i + 1) * a, i * b:(i + 1) * b].set(w)
    return out


def prepare_params(params, *, use_bf16_matmul=True):
    """One-time packing of weights/biases for the fused kernel.

    Keeps the scatter-like block-diagonal construction, bias tiling and bf16
    casts out of the per-call forward (they were 16 extra XLA ops per call).
    """
    input_size = params["w1"].shape[0]
    p = _packing_factor(input_size)
    mm_dtype = jnp.bfloat16 if use_bf16_matmul else jnp.float32
    packed = {}
    for name in ("w1", "w2", "w3", "w4"):
        packed[name] = _block_diag(params[name], p).astype(mm_dtype)
    for name in ("b1", "b2", "b3", "b4"):
        packed[name] = jnp.tile(params[name], (1, p)).astype(jnp.float32)
    return packed


def ae_2hl_kernel(
    x_ref,
    w1_ref, b1_ref,
    w2_ref, b2_ref,
    w3_ref, b3_ref,
    w4_ref, b4_ref,
    o_ref,
):
    """Fused 4-layer MLP autoencoder on one packed batch tile.

    x_ref : (rows, p*input_size) f32 — p batch rows packed per row (lane-dense).
    wN_ref: p-way block-diagonal weights [p*in, p*out] (bf16 or f32).
    bN_ref: p-tiled biases [1, p*out] f32.
    """
    mm_dtype = w1_ref.dtype  # bf16 (default) or f32 for the MXU operands
    x = x_ref[...]

    # encoder
    h = jnp.tanh(
        jnp.dot(x.astype(mm_dtype), w1_ref[...],
                preferred_element_type=jnp.float32) + b1_ref[...]
    )
    z = _leaky_relu(
        jnp.dot(h.astype(mm_dtype), w2_ref[...],
                preferred_element_type=jnp.float32) + b2_ref[...]
    )

    # decoder
    h = jnp.tanh(
        jnp.dot(z.astype(mm_dtype), w3_ref[...],
                preferred_element_type=jnp.float32) + b3_ref[...]
    )
    y = _leaky_relu(
        jnp.dot(h.astype(mm_dtype), w4_ref[...],
                preferred_element_type=jnp.float32) + b4_ref[...]
    )

    o_ref[...] = y.astype(o_ref.dtype)


@functools.partial(jax.jit, static_argnames=("batch_tile",))
def ae_2hl_forward(x, prepped, *, batch_tile=16384):
    """x: [B, input_size] float32. prepped: output of prepare_params()."""
    B, input_size = x.shape
    p = _packing_factor(input_size)
    lanes = p * input_size
    assert prepped["w1"].shape[0] == lanes, "params packed with a different p"
    hl1 = prepped["w1"].shape[1] // p
    hl2 = prepped["w2"].shape[1] // p

    # Pad the batch only to the packing granule: a multiple of p so the
    # lane-packing reshape is a free row-major reshape, and at least 8*p rows
    # so the packed array has one full sublane tile.  This is at most 31 extra
    # rows — not a full pad-to-tile pass over HBM.  The (possibly partial)
    # last grid block is masked by Pallas.
    B_pad = max(_round_up(B, p), 8 * p)
    xp = x if B_pad == B else jnp.pad(x, ((0, B_pad - B), (0, 0)))
    R = B_pad // p                       # packed rows (array extent)
    xp = xp.reshape(R, lanes)

    # Packed rows per grid step: honor batch_tile, but
    #   (a) stay under the per-step VMEM budget (v7x has only 64 MiB VMEM),
    #   (b) split medium/large batches into >= 2 steps (v7x has 2 TensorCores),
    #   (c) keep blocks 8-row aligned and never larger than the packed array.
    blk = _cdiv(max(int(batch_tile), 1), p)
    blk = min(blk, _VMEM_PACKED_ROW_CAP)
    if R > _SINGLE_STEP_PACKED_ROWS:
        blk = min(blk, _cdiv(R, 2))
    blk = max(8, min(_round_up(blk, 8), (R // 8) * 8))
    grid_len = _cdiv(R, blk)
    # Prefer an even number of grid steps (balanced across v7x's two TCs).
    if grid_len > 1 and grid_len % 2 == 1:
        alt = max(8, _round_up(_cdiv(R, grid_len + 1), 8))
        if alt <= (R // 8) * 8 and _cdiv(R, alt) % 2 == 0:
            blk, grid_len = alt, _cdiv(R, alt)

    w1, b1 = prepped["w1"], prepped["b1"]
    w2, b2 = prepped["w2"], prepped["b2"]
    w3, b3 = prepped["w3"], prepped["b3"]
    w4, b4 = prepped["w4"], prepped["b4"]

    # Weights/biases: constant index_map -> resident in VMEM across the grid.
    def full(arr):
        return pl.BlockSpec(arr.shape, lambda i: (0, 0))

    itemsize = jnp.dtype(x.dtype).itemsize
    logical_macs = input_size * hl1 + hl1 * hl2 + hl2 * hl1 + hl1 * input_size
    param_bytes = sum(int(a.size) * jnp.dtype(a.dtype).itemsize
                      for a in (w1, b1, w2, b2, w3, b3, w4, b4))
    cost = pl.CostEstimate(
        flops=int(2 * B_pad * logical_macs),
        transcendentals=int(2 * B_pad * hl1),   # two tanh layers of width hl1
        bytes_accessed=int(2 * B_pad * input_size * itemsize + param_bytes),
    )

    out = pl.pallas_call(
        ae_2hl_kernel,
        out_shape=jax.ShapeDtypeStruct((R, lanes), x.dtype),
        grid_spec=pltpu.PrefetchScalarGridSpec(
            num_scalar_prefetch=0,
            grid=(grid_len,),
            in_specs=[
                pl.BlockSpec((blk, lanes), lambda i: (i, 0)),
                full(w1), full(b1),
                full(w2), full(b2),
                full(w3), full(b3),
                full(w4), full(b4),
            ],
            out_specs=pl.BlockSpec((blk, lanes), lambda i: (i, 0)),
        ),
        compiler_params=pltpu.CompilerParams(
            # Single batch axis, shardable across v7x's two TensorCores.
            dimension_semantics=("parallel",),
            # Default tile (packed [4096,128]) needs ~17 MiB, the cap (8192)
            # ~35 MiB: above v5e's 16 MiB default scoped limit but safely
            # under v7x's 64 MiB physical VMEM.
            vmem_limit_bytes=_VMEM_LIMIT_BYTES,
        ),
        cost_estimate=cost,
    )(xp, w1, b1, w2, b2, w3, b3, w4, b4)

    # Unpack back to [B, input_size] (free reshape); slice only if we padded.
    y = out.reshape(B_pad, input_size)
    return y if B_pad == B else y[:B]


def init_params(key, input_size, hl1, hl2):
    """Deterministic synthetic params, stored transposed to [in, out]."""
    ks = jax.random.split(key, 8)

    def linear(kw, kb, fan_in, fan_out):
        # Mimic PyTorch's U(-1/sqrt(fan_in), 1/sqrt(fan_in)) init.
        bound = 1.0 / jnp.sqrt(jnp.float32(fan_in))
        w = jax.random.uniform(kw, (fan_in, fan_out), jnp.float32, -bound, bound)
        b = jax.random.uniform(kb, (1, fan_out), jnp.float32, -bound, bound)
        return w, b

    w1, b1 = linear(ks[0], ks[1], input_size, hl1)
    w2, b2 = linear(ks[2], ks[3], hl1, hl2)
    w3, b3 = linear(ks[4], ks[5], hl2, hl1)
    w4, b4 = linear(ks[6], ks[7], hl1, input_size)
    return dict(w1=w1, b1=b1, w2=w2, b2=b2, w3=w3, b3=b3, w4=w4, b4=b4)


def ae_2hl_reference(x, params):
    """Pure-JAX reference matching the PyTorch forward."""
    h = jnp.tanh(x @ params["w1"] + params["b1"])
    z = _leaky_relu(h @ params["w2"] + params["b2"])
    h = jnp.tanh(z @ params["w3"] + params["b3"])
    y = _leaky_relu(h @ params["w4"] + params["b4"])
    return y


if __name__ == "__main__":
    input_size, hl1, hl2 = 32, 24, 12

    key = jax.random.PRNGKey(0)
    k_x, k_p = jax.random.split(key)
    params = init_params(k_p, input_size, hl1, hl2)

    # One-time packing (hoisted out of the per-call forward).
    prepped_f32 = prepare_params(params, use_bf16_matmul=False)
    prepped_bf16 = prepare_params(params, use_bf16_matmul=True)

    # Test 1: tiny batch (single partial block), f32 and bf16 MXU paths.
    x1 = jax.random.normal(k_x, (16, input_size), jnp.float32)
    ref1 = ae_2hl_reference(x1, params)

    out_f32 = jax.block_until_ready(ae_2hl_forward(x1, prepped_f32))
    assert out_f32.shape == x1.shape
    assert jnp.allclose(out_f32, ref1, atol=1e-4, rtol=1e-4), "f32 mismatch"

    out_bf16 = jax.block_until_ready(ae_2hl_forward(x1, prepped_bf16))
    assert out_bf16.shape == x1.shape
    assert jnp.allclose(out_bf16, ref1, atol=3e-2, rtol=3e-2), "bf16 mismatch"

    # Test 2: batch not a multiple of the tile -> multi-step grid with a
    # masked partial last block and zero wrapper-side pad/slice (100 % p == 0).
    x2 = jax.random.normal(jax.random.PRNGKey(1), (100, input_size), jnp.float32)
    ref2 = ae_2hl_reference(x2, params)
    out2 = jax.block_until_ready(
        ae_2hl_forward(x2, prepped_f32, batch_tile=64))
    assert out2.shape == x2.shape
    assert jnp.allclose(out2, ref2, atol=1e-4, rtol=1e-4), "multi-tile mismatch"

    # Test 3: batch not a multiple of the packing factor -> small pad + slice.
    x3 = jax.random.normal(jax.random.PRNGKey(2), (30, input_size), jnp.float32)
    ref3 = ae_2hl_reference(x3, params)
    out3 = jax.block_until_ready(ae_2hl_forward(x3, prepped_f32))
    assert out3.shape == x3.shape
    assert jnp.allclose(out3, ref3, atol=1e-4, rtol=1e-4), "padded-batch mismatch"

    print("KERNEL_OK")
</pallas_src>

<mosaic_0001>
module attributes {stable_mosaic.version = 11 : i64} {
  func.func @ae_2hl_kernel(%arg0: i32, %arg1: memref<8x128xf32, #tpu.memory_space<vmem>>, %arg2: memref<128x96xf32, #tpu.memory_space<vmem>>, %arg3: memref<1x96xf32, #tpu.memory_space<vmem>>, %arg4: memref<96x48xf32, #tpu.memory_space<vmem>>, %arg5: memref<1x48xf32, #tpu.memory_space<vmem>>, %arg6: memref<48x96xf32, #tpu.memory_space<vmem>>, %arg7: memref<1x96xf32, #tpu.memory_space<vmem>>, %arg8: memref<96x128xf32, #tpu.memory_space<vmem>>, %arg9: memref<1x128xf32, #tpu.memory_space<vmem>>, %arg10: memref<8x128xf32, #tpu.memory_space<vmem>>) attributes {dimension_semantics = [#tpu.dimension_semantics<parallel>], iteration_bounds = array<i64: 1>, scalar_prefetch = 0 : i64, scratch_operands = 0 : i64, tpu.core_type = #tpu.core_type<tc>, window_params = [{transform_indices = @transform_0, window_bounds = array<i64: 8, 128>}, {pipeline_mode = #tpu.pipeline_mode<synchronous>, transform_indices = @transform_1, window_bounds = array<i64: 128, 96>}, {pipeline_mode = #tpu.pipeline_mode<synchronous>, transform_indices = @transform_2, window_bounds = array<i64: 1, 96>}, {pipeline_mode = #tpu.pipeline_mode<synchronous>, transform_indices = @transform_3, window_bounds = array<i64: 96, 48>}, {pipeline_mode = #tpu.pipeline_mode<synchronous>, transform_indices = @transform_4, window_bounds = array<i64: 1, 48>}, {pipeline_mode = #tpu.pipeline_mode<synchronous>, transform_indices = @transform_5, window_bounds = array<i64: 48, 96>}, {pipeline_mode = #tpu.pipeline_mode<synchronous>, transform_indices = @transform_6, window_bounds = array<i64: 1, 96>}, {pipeline_mode = #tpu.pipeline_mode<synchronous>, transform_indices = @transform_7, window_bounds = array<i64: 96, 128>}, {pipeline_mode = #tpu.pipeline_mode<synchronous>, transform_indices = @transform_8, window_bounds = array<i64: 1, 128>}, {transform_indices = @transform_9, window_bounds = array<i64: 8, 128>}]} {
    %c0 = arith.constant 0 : index
    %c0_0 = arith.constant 0 : index
    %0 = vector.load %arg1[%c0, %c0_0] : memref<8x128xf32, #tpu.memory_space<vmem>>, vector<8x128xf32>
    %c0_1 = arith.constant 0 : index
    %c0_2 = arith.constant 0 : index
    %1 = vector.load %arg2[%c0_1, %c0_2] : memref<128x96xf32, #tpu.memory_space<vmem>>, vector<128x96xf32>
    %cst = arith.constant dense<0.000000e+00> : vector<8x96xf32>
    %2 = tpu.matmul %0, %1, %cst {dimension_numbers = #tpu.dot_dimension_numbers<[1], [0], [0], [1], [0, 0, 1, 1], [], []>} : vector<8x128xf32>, vector<128x96xf32>, vector<8x96xf32> -> vector<8x96xf32>
    %c0_3 = arith.constant 0 : index
    %c0_4 = arith.constant 0 : index
    %3 = vector.load %arg3[%c0_3, %c0_4] : memref<1x96xf32, #tpu.memory_space<vmem>>, vector<1x96xf32>
    %4 = vector.broadcast %3 : vector<1x96xf32> to vector<8x96xf32>
    %5 = arith.addf %2, %4 : vector<8x96xf32>
    %6 = math.tanh %5 : vector<8x96xf32>
    %c0_5 = arith.constant 0 : index
    %c0_6 = arith.constant 0 : index
    %7 = vector.load %arg4[%c0_5, %c0_6] : memref<96x48xf32, #tpu.memory_space<vmem>>, vector<96x48xf32>
    %cst_7 = arith.constant dense<0.000000e+00> : vector<8x48xf32>
    %8 = tpu.matmul %6, %7, %cst_7 {dimension_numbers = #tpu.dot_dimension_numbers<[1], [0], [0], [1], [0, 0, 1, 1], [], []>} : vector<8x96xf32>, vector<96x48xf32>, vector<8x48xf32> -> vector<8x48xf32>
    %c0_8 = arith.constant 0 : index
    %c0_9 = arith.constant 0 : index
    %9 = vector.load %arg5[%c0_8, %c0_9] : memref<1x48xf32, #tpu.memory_space<vmem>>, vector<1x48xf32>
    %10 = vector.broadcast %9 : vector<1x48xf32> to vector<8x48xf32>
    %11 = arith.addf %8, %10 : vector<8x48xf32>
    %cst_10 = arith.constant 0.000000e+00 : f32
    %12 = vector.broadcast %cst_10 : f32 to vector<8x48xf32>
    %13 = arith.cmpf ogt, %11, %12 : vector<8x48xf32>
    %cst_11 = arith.constant 0.00999999977 : f32
    %14 = vector.broadcast %cst_11 : f32 to vector<8x48xf32>
    %15 = arith.mulf %14, %11 : vector<8x48xf32>
    %16 = arith.select %13, %11, %15 : vector<8x48xi1>, vector<8x48xf32>
    %c0_12 = arith.constant 0 : index
    %c0_13 = arith.constant 0 : index
    %17 = vector.load %arg6[%c0_12, %c0_13] : memref<48x96xf32, #tpu.memory_space<vmem>>, vector<48x96xf32>
    %cst_14 = arith.constant dense<0.000000e+00> : vector<8x96xf32>
    %18 = tpu.matmul %16, %17, %cst_14 {dimension_numbers = #tpu.dot_dimension_numbers<[1], [0], [0], [1], [0, 0, 1, 1], [], []>} : vector<8x48xf32>, vector<48x96xf32>, vector<8x96xf32> -> vector<8x96xf32>
    %c0_15 = arith.constant 0 : index
    %c0_16 = arith.constant 0 : index
    %19 = vector.load %arg7[%c0_15, %c0_16] : memref<1x96xf32, #tpu.memory_space<vmem>>, vector<1x96xf32>
    %20 = vector.broadcast %19 : vector<1x96xf32> to vector<8x96xf32>
    %21 = arith.addf %18, %20 : vector<8x96xf32>
    %22 = math.tanh %21 : vector<8x96xf32>
    %c0_17 = arith.constant 0 : index
    %c0_18 = arith.constant 0 : index
    %23 = vector.load %arg8[%c0_17, %c0_18] : memref<96x128xf32, #tpu.memory_space<vmem>>, vector<96x128xf32>
    %cst_19 = arith.constant dense<0.000000e+00> : vector<8x128xf32>
    %24 = tpu.matmul %22, %23, %cst_19 {dimension_numbers = #tpu.dot_dimension_numbers<[1], [0], [0], [1], [0, 0, 1, 1], [], []>} : vector<8x96xf32>, vector<96x128xf32>, vector<8x128xf32> -> vector<8x128xf32>
    %c0_20 = arith.constant 0 : index
    %c0_21 = arith.constant 0 : index
    %25 = vector.load %arg9[%c0_20, %c0_21] : memref<1x128xf32, #tpu.memory_space<vmem>>, vector<1x128xf32>
    %26 = vector.broadcast %25 : vector<1x128xf32> to vector<8x128xf32>
    %27 = arith.addf %24, %26 : vector<8x128xf32>
    %cst_22 = arith.constant 0.000000e+00 : f32
    %28 = vector.broadcast %cst_22 : f32 to vector<8x128xf32>
    %29 = arith.cmpf ogt, %27, %28 : vector<8x128xf32>
    %cst_23 = arith.constant 0.00999999977 : f32
    %30 = vector.broadcast %cst_23 : f32 to vector<8x128xf32>
    %31 = arith.mulf %30, %27 : vector<8x128xf32>
    %32 = arith.select %29, %27, %31 : vector<8x128xi1>, vector<8x128xf32>
    %c0_24 = arith.constant 0 : index
    %c0_25 = arith.constant 0 : index
    %33 = vector.load %arg10[%c0_24, %c0_25] : memref<8x128xf32, #tpu.memory_space<vmem>>, vector<8x128xf32>
    tpu.vector_store %arg10[%c0_24, %c0_25], %32 {strides = array<i32>} : memref<8x128xf32, #tpu.memory_space<vmem>>, vector<8x128xf32>,
    return
  }
  func.func @transform_0(%arg0: i32) -> (i32, i32) {
    %c0_i32 = arith.constant 0 : i32
    %c0_i32_0 = arith.constant 0 : i32
    return %arg0, %c0_i32 : i32, i32
  }
  func.func @transform_1(%arg0: i32) -> (i32, i32) {
    %c0_i32 = arith.constant 0 : i32
    %c0_i32_0 = arith.constant 0 : i32
    %c0_i32_1 = arith.constant 0 : i32
    return %c0_i32, %c0_i32_0 : i32, i32
  }
  func.func @transform_2(%arg0: i32) -> (i32, i32) {
    %c0_i32 = arith.constant 0 : i32
    %c0_i32_0 = arith.constant 0 : i32
    %c0_i32_1 = arith.constant 0 : i32
    return %c0_i32, %c0_i32_0 : i32, i32
  }
  func.func @transform_3(%arg0: i32) -> (i32, i32) {
    %c0_i32 = arith.constant 0 : i32
    %c0_i32_0 = arith.constant 0 : i32
    %c0_i32_1 = arith.constant 0 : i32
    return %c0_i32, %c0_i32_0 : i32, i32
  }
  func.func @transform_4(%arg0: i32) -> (i32, i32) {
    %c0_i32 = arith.constant 0 : i32
    %c0_i32_0 = arith.constant 0 : i32
    %c0_i32_1 = arith.constant 0 : i32
    return %c0_i32, %c0_i32_0 : i32, i32
  }
  func.func @transform_5(%arg0: i32) -> (i32, i32) {
    %c0_i32 = arith.constant 0 : i32
    %c0_i32_0 = arith.constant 0 : i32
    %c0_i32_1 = arith.constant 0 : i32
    return %c0_i32, %c0_i32_0 : i32, i32
  }
  func.func @transform_6(%arg0: i32) -> (i32, i32) {
    %c0_i32 = arith.constant 0 : i32
    %c0_i32_0 = arith.constant 0 : i32
    %c0_i32_1 = arith.constant 0 : i32
    return %c0_i32, %c0_i32_0 : i32, i32
  }
  func.func @transform_7(%arg0: i32) -> (i32, i32) {
    %c0_i32 = arith.constant 0 : i32
    %c0_i32_0 = arith.constant 0 : i32
    %c0_i32_1 = arith.constant 0 : i32
    return %c0_i32, %c0_i32_0 : i32, i32
  }
  func.func @transform_8(%arg0: i32) -> (i32, i32) {
    %c0_i32 = arith.constant 0 : i32
    %c0_i32_0 = arith.constant 0 : i32
    %c0_i32_1 = arith.constant 0 : i32
    return %c0_i32, %c0_i32_0 : i32, i32
  }
  func.func @transform_9(%arg0: i32) -> (i32, i32) {
    %c0_i32 = arith.constant 0 : i32
    %c0_i32_0 = arith.constant 0 : i32
    return %arg0, %c0_i32 : i32, i32
  }
}

</mosaic_0001>

<llo_original>
// kernel: ae_2hl_forward.1
$region0: #{ae_2hl_forward.1}
  #allocation0 [shape = 'u32[]', space=smem, size = 0x4, offset = 0x4, fixed_abs, tag = 'smem constant byte address 0x4 - core index']
  #allocation1 [shape = 'u32[144,128]{1,0:T(1,128)}', space=vmem, size = 0x12000, scoped, tag = 'internal scratch']
  %s0 = inlined_call_operand.vmem [shape: f32[8,128], index: 0, kind: input, shape index: {}]
  %s1 = inlined_call_operand.vmem [shape: f32[128,96], index: 1, kind: input, shape index: {}]
  %s2 = inlined_call_operand.vmem [shape: f32[1,96], index: 2, kind: input, shape index: {}]
  %s3 = inlined_call_operand.vmem [shape: f32[96,48], index: 3, kind: input, shape index: {}]
  %s4 = inlined_call_operand.vmem [shape: f32[1,48], index: 4, kind: input, shape index: {}]
  %s5 = inlined_call_operand.vmem [shape: f32[48,96], index: 5, kind: input, shape index: {}]
  %s6 = inlined_call_operand.vmem [shape: f32[1,96], index: 6, kind: input, shape index: {}]
  %s7 = inlined_call_operand.vmem [shape: f32[96,128], index: 7, kind: input, shape index: {}]
  %s8 = inlined_call_operand.vmem [shape: f32[1,128], index: 8, kind: input, shape index: {}]
  %s9 = inlined_call_operand.vmem [shape: f32[8,128], index: 9, kind: output, shape index: {}]
  %s10 = sld [smem:[#allocation0]]
  $region46: #{ae_2hl_forward.1} parent=0
    _
  %s12 = ssub.s32 1, %s10
  %s13 = scalar_select 0, %s12, %s10
  // Predicated region
  $region2: #{ae_2hl_forward.1} parent=0 // pred_check
    _
  $region3: #{ae_2hl_forward.1} parent=0 // pred_check_branch
    %15 = sbr.rel (0) target = $region5
  $region4: #{ae_2hl_forward.1} parent=0 // pred_region
    _
  $region5: #{ae_2hl_forward.1} parent=0 // pred_fallthru
    _
  // Predicated region
  $region6: #{ae_2hl_forward.1} parent=0 // pred_check
    _
  $region7: #{ae_2hl_forward.1} parent=0 // pred_check_branch
    %17 = sbr.rel (0) target = $region9
  $region8: #{ae_2hl_forward.1} parent=0 // pred_region
    _
  $region9: #{ae_2hl_forward.1} parent=0 // pred_fallthru
    _
  // Predicated region
  $region10: #{ae_2hl_forward.1} parent=0 // pred_check
    _
  $region11: #{ae_2hl_forward.1} parent=0 // pred_check_branch
    %19 = sbr.rel (0) target = $region13
  $region12: #{ae_2hl_forward.1} parent=0 // pred_region
    _
  $region13: #{ae_2hl_forward.1} parent=0 // pred_fallthru
    _
  // Predicated region
  $region14: #{ae_2hl_forward.1} parent=0 // pred_check
    _
  $region15: #{ae_2hl_forward.1} parent=0 // pred_check_branch
    %21 = sbr.rel (0) target = $region17
  $region16: #{ae_2hl_forward.1} parent=0 // pred_region
    _
  $region17: #{ae_2hl_forward.1} parent=0 // pred_fallthru
    _
  // Predicated region
  $region18: #{ae_2hl_forward.1} parent=0 // pred_check
    _
  $region19: #{ae_2hl_forward.1} parent=0 // pred_check_branch
    %23 = sbr.rel (0) target = $region21
  $region20: #{ae_2hl_forward.1} parent=0 // pred_region
    _
  $region21: #{ae_2hl_forward.1} parent=0 // pred_fallthru
    _
  // Predicated region
  $region22: #{ae_2hl_forward.1} parent=0 // pred_check
    _
  $region23: #{ae_2hl_forward.1} parent=0 // pred_check_branch
    %25 = sbr.rel (0) target = $region25
  $region24: #{ae_2hl_forward.1} parent=0 // pred_region
    _
  $region25: #{ae_2hl_forward.1} parent=0 // pred_fallthru
    _
  // Predicated region
  $region26: #{ae_2hl_forward.1} parent=0 // pred_check
    _
  $region27: #{ae_2hl_forward.1} parent=0 // pred_check_branch
    %27 = sbr.rel (0) target = $region29
  $region28: #{ae_2hl_forward.1} parent=0 // pred_region
    _
  $region29: #{ae_2hl_forward.1} parent=0 // pred_fallthru
    _
  // Predicated region
  $region30: #{ae_2hl_forward.1} parent=0 // pred_check
    _
  $region31: #{ae_2hl_forward.1} parent=0 // pred_check_branch
    %29 = sbr.rel (0) target = $region33
  $region32: #{ae_2hl_forward.1} parent=0 // pred_region
    _
  $region33: #{ae_2hl_forward.1} parent=0 // pred_fallthru
    _
  // Predicated region
  $region34: #{ae_2hl_forward.1} parent=0 // pred_check
    _
  $region35: #{ae_2hl_forward.1} parent=0 // pred_check_branch
    %31 = sbr.rel (0) target = $region37
  $region36: #{ae_2hl_forward.1} parent=0 // pred_region
    _
  $region37: #{ae_2hl_forward.1} parent=0 // pred_fallthru
    _
  %v32 = vld [vmem:[%s0] sm:$0xff]
  %v33 = vld [vmem:[%s1] sm:$0xff]
  %v34 = vld [vmem:[%s1 + $0x8] sm:$0xff]
  %v35 = vld [vmem:[%s1 + $0x10] sm:$0xff]
  %v36 = vld [vmem:[%s1 + $0x18] sm:$0xff]
  %v37 = vld [vmem:[%s1 + $0x20] sm:$0xff]
  %v38 = vld [vmem:[%s1 + $0x28] sm:$0xff]
  %v39 = vld [vmem:[%s1 + $0x30] sm:$0xff]
  %v40 = vld [vmem:[%s1 + $0x38] sm:$0xff]
  %v41 = vld [vmem:[%s1 + $0x40] sm:$0xff]
  %v42 = vld [vmem:[%s1 + $0x48] sm:$0xff]
  %v43 = vld [vmem:[%s1 + $0x50] sm:$0xff]
  %v44 = vld [vmem:[%s1 + $0x58] sm:$0xff]
  %v45 = vld [vmem:[%s1 + $0x60] sm:$0xff]
  %v46 = vld [vmem:[%s1 + $0x68] sm:$0xff]
  %v47 = vld [vmem:[%s1 + $0x70] sm:$0xff]
  %v48 = vld [vmem:[%s1 + $0x78] sm:$0xff]
  %v49 = vld [vmem:[%s2] sm:$0x1]
  %v51 = vlaneseq
  %v52 = vshrl.u32 %v51, 7
  %v53 = vsub.s32 0, %v52
  %v54 = vrot.slane %v49, %v53
  %56 = vmatprep.subr.mxu0 0.0
  %57 = vmatpush1.msra.mxu0 %v33
  %58 = vmatprep.subr.mxu0 0.0
  %59 = vmatpush1.msra.mxu0 %v34
  %60 = vmatprep.subr.mxu0 0.0
  %61 = vmatpush1.msra.mxu0 %v35
  %62 = vmatprep.subr.mxu0 0.0
  %63 = vmatpush1.msra.mxu0 %v36
  %64 = vmatprep.subr.mxu0 0.0
  %65 = vmatpush1.msra.mxu0 %v37
  %66 = vmatprep.subr.mxu0 0.0
  %67 = vmatpush1.msra.mxu0 %v38
  %68 = vmatprep.subr.mxu0 0.0
  %69 = vmatpush1.msra.mxu0 %v39
  %70 = vmatprep.subr.mxu0 0.0
  %71 = vmatpush1.msra.mxu0 %v40
  %72 = vmatprep.subr.mxu0 0.0
  %73 = vmatpush1.msra.mxu0 %v41
  %74 = vmatprep.subr.mxu0 0.0
  %75 = vmatpush1.msra.mxu0 %v42
  %76 = vmatprep.subr.mxu0 0.0
  %77 = vmatpush1.msra.mxu0 %v43
  %78 = vmatprep.subr.mxu0 0.0
  %79 = vmatpush1.msra.mxu0 %v44
  %80 = vmatprep.subr.mxu0 0.0
  %81 = vmatpush1.msra.mxu0 %v45
  %82 = vmatprep.subr.mxu0 0.0
  %83 = vmatpush1.msra.mxu0 %v46
  %84 = vmatprep.subr.mxu0 0.0
  %85 = vmatpush1.msra.mxu0 %v47
  %86 = vmatprep.subr.mxu0 0.0
  %87 = vmatpush1.msra.mxu0 %v48
  %88 = vmatprep.subr.mxu0 0.0
  %89 = vmatpush1.msra.mxu0 0.0
  %90 = vmatprep.subr.mxu0 0.0
  %91 = vmatpush1.msra.mxu0 0.0
  %92 = vmatprep.subr.mxu0 0.0
  %93 = vmatpush1.msra.mxu0 0.0
  %94 = vmatprep.subr.mxu0 0.0
  %95 = vmatpush1.msra.mxu0 0.0
  %96 = vmatprep.subr.mxu0 0.0
  %97 = vmatpush1.msra.mxu0 0.0
  %98 = vmatprep.subr.mxu0 0.0
  %99 = vmatpush1.msra.mxu0 0.0
  %100 = vmatprep.subr.mxu0 0.0
  %101 = vmatpush1.msra.mxu0 0.0
  %102 = vmatprep.subr.mxu0 0.0
  %103 = vmatpush1.msra.mxu0 0.0
  %104 = vmatprep.subr.mxu0 0.0
  %105 = vmatpush1.msra.mxu0 0.0
  %106 = vmatprep.subr.mxu0 0.0
  %107 = vmatpush1.msra.mxu0 0.0
  %108 = vmatprep.subr.mxu0 0.0
  %109 = vmatpush1.msra.mxu0 0.0
  %110 = vmatprep.subr.mxu0 0.0
  %111 = vmatpush1.msra.mxu0 0.0
  %112 = vmatprep.subr.mxu0 0.0
  %113 = vmatpush1.msra.mxu0 0.0
  %114 = vmatprep.subr.mxu0 0.0
  %115 = vmatpush1.msra.mxu0 0.0
  %116 = vmatprep.subr.mxu0 0.0
  %117 = vmatpush1.msra.mxu0 0.0
  %118 = vmatprep.subr.mxu0 0.0
  %119 = vmatpush1.msra.mxu0 0.0
  %120 = vmatprep.mubr.f32.mxu0 0.0
  %121 = vmatmul.mubr.f32.gmra.mrb[0].mxu0 %v32
  %v122 = vpop.f32.mrb[0].mxu0
  %v123 = vadd.f32 %v54, %v122
  %v124 = vpop.f32.mrb[0].mxu0
  %125 = vdwg.mxu0
  %v126 = vtanh.pop %v123
  %v127 = vld [vmem:[%s3] sm:$0xff]
  %v128 = vld [vmem:[%s3 + $0x8] sm:$0xff]
  %v129 = vld [vmem:[%s3 + $0x10] sm:$0xff]
  %v130 = vld [vmem:[%s3 + $0x18] sm:$0xff]
  %v131 = vld [vmem:[%s3 + $0x20] sm:$0xff]
  %v132 = vld [vmem:[%s3 + $0x28] sm:$0xff]
  %v133 = vld [vmem:[%s3 + $0x30] sm:$0xff]
  %v134 = vld [vmem:[%s3 + $0x38] sm:$0xff]
  %v135 = vld [vmem:[%s3 + $0x40] sm:$0xff]
  %v136 = vld [vmem:[%s3 + $0x48] sm:$0xff]
  %v137 = vld [vmem:[%s3 + $0x50] sm:$0xff]
  %v138 = vld [vmem:[%s3 + $0x58] sm:$0xff]
  %v139 = vld [vmem:[%s4] sm:$0x1]
  %v141 = vlaneseq
  %v142 = vshrl.u32 %v141, 7
  %v143 = vsub.s32 0, %v142
  %v144 = vrot.slane %v139, %v143
  %vm146 = vcmask 785408
  %v148 = vsel %vm146, %v126, 0
  %150 = vmatprep.subr.mxu0 0.0
  %151 = vmatpush1.msra.mxu0 %v127
  %152 = vmatprep.subr.mxu0 0.0
  %153 = vmatpush1.msra.mxu0 %v128
  %154 = vmatprep.subr.mxu0 0.0
  %155 = vmatpush1.msra.mxu0 %v129
  %156 = vmatprep.subr.mxu0 0.0
  %157 = vmatpush1.msra.mxu0 %v130
  %158 = vmatprep.subr.mxu0 0.0
  %159 = vmatpush1.msra.mxu0 %v131
  %160 = vmatprep.subr.mxu0 0.0
  %161 = vmatpush1.msra.mxu0 %v132
  %162 = vmatprep.subr.mxu0 0.0
  %163 = vmatpush1.msra.mxu0 %v133
  %164 = vmatprep.subr.mxu0 0.0
  %165 = vmatpush1.msra.mxu0 %v134
  %166 = vmatprep.subr.mxu0 0.0
  %167 = vmatpush1.msra.mxu0 %v135
  %168 = vmatprep.subr.mxu0 0.0
  %169 = vmatpush1.msra.mxu0 %v136
  %170 = vmatprep.subr.mxu0 0.0
  %171 = vmatpush1.msra.mxu0 %v137
  %172 = vmatprep.subr.mxu0 0.0
  %173 = vmatpush1.msra.mxu0 %v138
  %174 = vmatprep.subr.mxu0 0.0
  %175 = vmatpush1.msra.mxu0 0.0
  %176 = vmatprep.subr.mxu0 0.0
  %177 = vmatpush1.msra.mxu0 0.0
  %178 = vmatprep.subr.mxu0 0.0
  %179 = vmatpush1.msra.mxu0 0.0
  %180 = vmatprep.subr.mxu0 0.0
  %181 = vmatpush1.msra.mxu0 0.0
  %182 = vmatprep.subr.mxu0 0.0
  %183 = vmatpush1.msra.mxu0 0.0
  %184 = vmatprep.subr.mxu0 0.0
  %185 = vmatpush1.msra.mxu0 0.0
  %186 = vmatprep.subr.mxu0 0.0
  %187 = vmatpush1.msra.mxu0 0.0
  %188 = vmatprep.subr.mxu0 0.0
  %189 = vmatpush1.msra.mxu0 0.0
  %190 = vmatprep.subr.mxu0 0.0
  %191 = vmatpush1.msra.mxu0 0.0
  %192 = vmatprep.subr.mxu0 0.0
  %193 = vmatpush1.msra.mxu0 0.0
  %194 = vmatprep.subr.mxu0 0.0
  %195 = vmatpush1.msra.mxu0 0.0
  %196 = vmatprep.subr.mxu0 0.0
  %197 = vmatpush1.msra.mxu0 0.0
  %198 = vmatprep.subr.mxu0 0.0
  %199 = vmatpush1.msra.mxu0 0.0
  %200 = vmatprep.subr.mxu0 0.0
  %201 = vmatpush1.msra.mxu0 0.0
  %202 = vmatprep.subr.mxu0 0.0
  %203 = vmatpush1.msra.mxu0 0.0
  %204 = vmatprep.subr.mxu0 0.0
  %205 = vmatpush1.msra.mxu0 0.0
  %206 = vmatprep.subr.mxu0 0.0
  %207 = vmatpush1.msra.mxu0 0.0
  %208 = vmatprep.subr.mxu0 0.0
  %209 = vmatpush1.msra.mxu0 0.0
  %210 = vmatprep.subr.mxu0 0.0
  %211 = vmatpush1.msra.mxu0 0.0
  %212 = vmatprep.subr.mxu0 0.0
  %213 = vmatpush1.msra.mxu0 0.0
  %214 = vmatprep.mubr.f32.mxu0 0.0
  %215 = vmatmul.mubr.f32.gmra.mrb[0].mxu0 %v148
  %v216 = vpop.f32.mrb[0].mxu0
  %v217 = vadd.f32 %v144, %v216
  %v218 = vpop.f32.mrb[0].mxu0
  %219 = vdwg.mxu0
  %vm220 = vcmp.gt.f32.partialorder %v217, 0.0
  %v221 = vmul.f32 %v217, 0.01
  %v222 = vsel %vm220, %v217, %v221
  %v223 = vld [vmem:[%s5] sm:$0xff]
  %v224 = vld [vmem:[%s5 + $0x8] sm:$0xff]
  %v225 = vld [vmem:[%s5 + $0x10] sm:$0xff]
  %v226 = vld [vmem:[%s5 + $0x18] sm:$0xff]
  %v227 = vld [vmem:[%s5 + $0x20] sm:$0xff]
  %v228 = vld [vmem:[%s5 + $0x28] sm:$0xff]
  %v229 = vld [vmem:[%s6] sm:$0x1]
  %v231 = vlaneseq
  %v232 = vshrl.u32 %v231, 7
  %v233 = vsub.s32 0, %v232
  %v234 = vrot.slane %v229, %v233
  %vm236 = vcmask 392192
  %v238 = vsel %vm236, %v222, 0
  %240 = vmatprep.subr.mxu0 0.0
  %241 = vmatpush1.msra.mxu0 %v223
  %242 = vmatprep.subr.mxu0 0.0
  %243 = vmatpush1.msra.mxu0 %v224
  %244 = vmatprep.subr.mxu0 0.0
  %245 = vmatpush1.msra.mxu0 %v225
  %246 = vmatprep.subr.mxu0 0.0
  %247 = vmatpush1.msra.mxu0 %v226
  %248 = vmatprep.subr.mxu0 0.0
  %249 = vmatpush1.msra.mxu0 %v227
  %250 = vmatprep.subr.mxu0 0.0
  %251 = vmatpush1.msra.mxu0 %v228
  %252 = vmatprep.subr.mxu0 0.0
  %253 = vmatpush1.msra.mxu0 0.0
  %254 = vmatprep.subr.mxu0 0.0
  %255 = vmatpush1.msra.mxu0 0.0
  %256 = vmatprep.subr.mxu0 0.0
  %257 = vmatpush1.msra.mxu0 0.0
  %258 = vmatprep.subr.mxu0 0.0
  %259 = vmatpush1.msra.mxu0 0.0
  %260 = vmatprep.subr.mxu0 0.0
  %261 = vmatpush1.msra.mxu0 0.0
  %262 = vmatprep.subr.mxu0 0.0
  %263 = vmatpush1.msra.mxu0 0.0
  %264 = vmatprep.subr.mxu0 0.0
  %265 = vmatpush1.msra.mxu0 0.0
  %266 = vmatprep.subr.mxu0 0.0
  %267 = vmatpush1.msra.mxu0 0.0
  %268 = vmatprep.subr.mxu0 0.0
  %269 = vmatpush1.msra.mxu0 0.0
  %270 = vmatprep.subr.mxu0 0.0
  %271 = vmatpush1.msra.mxu0 0.0
  %272 = vmatprep.subr.mxu0 0.0
  %273 = vmatpush1.msra.mxu0 0.0
  %274 = vmatprep.subr.mxu0 0.0
  %275 = vmatpush1.msra.mxu0 0.0
  %276 = vmatprep.subr.mxu0 0.0
  %277 = vmatpush1.msra.mxu0 0.0
  %278 = vmatprep.subr.mxu0 0.0
  %279 = vmatpush1.msra.mxu0 0.0
  %280 = vmatprep.subr.mxu0 0.0
  %281 = vmatpush1.msra.mxu0 0.0
  %282 = vmatprep.subr.mxu0 0.0
  %283 = vmatpush1.msra.mxu0 0.0
  %284 = vmatprep.subr.mxu0 0.0
  %285 = vmatpush1.msra.mxu0 0.0
  %286 = vmatprep.subr.mxu0 0.0
  %287 = vmatpush1.msra.mxu0 0.0
  %288 = vmatprep.subr.mxu0 0.0
  %289 = vmatpush1.msra.mxu0 0.0
  %290 = vmatprep.subr.mxu0 0.0
  %291 = vmatpush1.msra.mxu0 0.0
  %292 = vmatprep.subr.mxu0 0.0
  %293 = vmatpush1.msra.mxu0 0.0
  %294 = vmatprep.subr.mxu0 0.0
  %295 = vmatpush1.msra.mxu0 0.0
  %296 = vmatprep.subr.mxu0 0.0
  %297 = vmatpush1.msra.mxu0 0.0
  %298 = vmatprep.subr.mxu0 0.0
  %299 = vmatpush1.msra.mxu0 0.0
  %300 = vmatprep.subr.mxu0 0.0
  %301 = vmatpush1.msra.mxu0 0.0
  %302 = vmatprep.subr.mxu0 0.0
  %303 = vmatpush1.msra.mxu0 0.0
  %304 = vmatprep.mubr.f32.mxu0 0.0
  %305 = vmatmul.mubr.f32.gmra.mrb[0].mxu0 %v238
  %v306 = vpop.f32.mrb[0].mxu0
  %v307 = vadd.f32 %v234, %v306
  %v308 = vpop.f32.mrb[0].mxu0
  %309 = vdwg.mxu0
  %v310 = vtanh.pop %v307
  %v311 = vld [vmem:[%s7] sm:$0xff]
  %v312 = vld [vmem:[%s7 + $0x8] sm:$0xff]
  %v313 = vld [vmem:[%s7 + $0x10] sm:$0xff]
  %v314 = vld [vmem:[%s7 + $0x18] sm:$0xff]
  %v315 = vld [vmem:[%s7 + $0x20] sm:$0xff]
  %v316 = vld [vmem:[%s7 + $0x28] sm:$0xff]
  %v317 = vld [vmem:[%s7 + $0x30] sm:$0xff]
  %v318 = vld [vmem:[%s7 + $0x38] sm:$0xff]
  %v319 = vld [vmem:[%s7 + $0x40] sm:$0xff]
  %v320 = vld [vmem:[%s7 + $0x48] sm:$0xff]
  %v321 = vld [vmem:[%s7 + $0x50] sm:$0xff]
  %v322 = vld [vmem:[%s7 + $0x58] sm:$0xff]
  %v323 = vld [vmem:[%s8] sm:$0x1]
  %v325 = vlaneseq
  %v326 = vshrl.u32 %v325, 7
  %v327 = vsub.s32 0, %v326
  %v328 = vrot.slane %v323, %v327
  %v331 = vsel %vm146, %v310, 0
  %333 = vmatprep.subr.mxu0 0.0
  %334 = vmatpush1.msra.mxu0 %v311
  %335 = vmatprep.subr.mxu0 0.0
  %336 = vmatpush1.msra.mxu0 %v312
  %337 = vmatprep.subr.mxu0 0.0
  %338 = vmatpush1.msra.mxu0 %v313
  %339 = vmatprep.subr.mxu0 0.0
  %340 = vmatpush1.msra.mxu0 %v314
  %341 = vmatprep.subr.mxu0 0.0
  %342 = vmatpush1.msra.mxu0 %v315
  %343 = vmatprep.subr.mxu0 0.0
  %344 = vmatpush1.msra.mxu0 %v316
  %345 = vmatprep.subr.mxu0 0.0
  %346 = vmatpush1.msra.mxu0 %v317
  %347 = vmatprep.subr.mxu0 0.0
  %348 = vmatpush1.msra.mxu0 %v318
  %349 = vmatprep.subr.mxu0 0.0
  %350 = vmatpush1.msra.mxu0 %v319
  %351 = vmatprep.subr.mxu0 0.0
  %352 = vmatpush1.msra.mxu0 %v320
  %353 = vmatprep.subr.mxu0 0.0
  %354 = vmatpush1.msra.mxu0 %v321
  %355 = vmatprep.subr.mxu0 0.0
  %356 = vmatpush1.msra.mxu0 %v322
  %357 = vmatprep.subr.mxu0 0.0
  %358 = vmatpush1.msra.mxu0 0.0
  %359 = vmatprep.subr.mxu0 0.0
  %360 = vmatpush1.msra.mxu0 0.0
  %361 = vmatprep.subr.mxu0 0.0
  %362 = vmatpush1.msra.mxu0 0.0
  %363 = vmatprep.subr.mxu0 0.0
  %364 = vmatpush1.msra.mxu0 0.0
  %365 = vmatprep.subr.mxu0 0.0
  %366 = vmatpush1.msra.mxu0 0.0
  %367 = vmatprep.subr.mxu0 0.0
  %368 = vmatpush1.msra.mxu0 0.0
  %369 = vmatprep.subr.mxu0 0.0
  %370 = vmatpush1.msra.mxu0 0.0
  %371 = vmatprep.subr.mxu0 0.0
  %372 = vmatpush1.msra.mxu0 0.0
  %373 = vmatprep.subr.mxu0 0.0
  %374 = vmatpush1.msra.mxu0 0.0
  %375 = vmatprep.subr.mxu0 0.0
  %376 = vmatpush1.msra.mxu0 0.0
  %377 = vmatprep.subr.mxu0 0.0
  %378 = vmatpush1.msra.mxu0 0.0
  %379 = vmatprep.subr.mxu0 0.0
  %380 = vmatpush1.msra.mxu0 0.0
  %381 = vmatprep.subr.mxu0 0.0
  %382 = vmatpush1.msra.mxu0 0.0
  %383 = vmatprep.subr.mxu0 0.0
  %384 = vmatpush1.msra.mxu0 0.0
  %385 = vmatprep.subr.mxu0 0.0
  %386 = vmatpush1.msra.mxu0 0.0
  %387 = vmatprep.subr.mxu0 0.0
  %388 = vmatpush1.msra.mxu0 0.0
  %389 = vmatprep.subr.mxu0 0.0
  %390 = vmatpush1.msra.mxu0 0.0
  %391 = vmatprep.subr.mxu0 0.0
  %392 = vmatpush1.msra.mxu0 0.0
  %393 = vmatprep.subr.mxu0 0.0
  %394 = vmatpush1.msra.mxu0 0.0
  %395 = vmatprep.subr.mxu0 0.0
  %396 = vmatpush1.msra.mxu0 0.0
  %397 = vmatprep.mubr.f32.mxu0 0.0
  %398 = vmatmul.mubr.f32.gmra.mrb[0].mxu0 %v331
  %v399 = vpop.f32.mrb[0].mxu0
  %v400 = vadd.f32 %v328, %v399
  %v401 = vpop.f32.mrb[0].mxu0
  %402 = vdwg.mxu0
  %vm403 = vcmp.gt.f32.partialorder %v400, 0.0
  %v404 = vmul.f32 %v400, 0.01
  %v405 = vsel %vm403, %v400, %v404
  %406 = vst [vmem:[%s9] sm:$0xff] %v405
  // Predicated region
  $region38: #{ae_2hl_forward.1} parent=0 // pred_check
    _
  $region39: #{ae_2hl_forward.1} parent=0 // pred_check_branch
    %408 = sbr.rel (0) target = $region41
  $region40: #{ae_2hl_forward.1} parent=0 // pred_region
    _
  $region41: #{ae_2hl_forward.1} parent=0 // pred_fallthru
    _
  // Predicated region
  $region42: #{ae_2hl_forward.1} parent=0 // pred_check
    _
  $region43: #{ae_2hl_forward.1} parent=0 // pred_check_branch
    %410 = sbr.rel (0) target = $region45
  $region44: #{ae_2hl_forward.1} parent=0 // pred_region
    _
  $region45: #{ae_2hl_forward.1} parent=0 // pred_fallthru
    _

</llo_original>
